<compile_context>
chip_gen: v7x
topology: tpu7x:2x2x1
jax: 0.10.0
libtpu: 0.0.40
codegen_flags: <defaults>
</compile_context>

<pallas_src>
import functools

import jax
import jax.numpy as jnp
from jax import lax
from jax.experimental import pallas as pl
from jax.experimental.pallas import tpu as pltpu


# --------------------------- hardware-aware sizing ---------------------------

def _tpu_vmem_bytes():
    """Physical VMEM of the local TPU generation (fallback: v7x-sized 64 MiB)."""
    try:
        info = pltpu.get_tpu_info()
        phys = int(getattr(info, "vmem_capacity_bytes"))
        if phys > 0:
            return phys
    except Exception:
        pass
    return 64 << 20


def _vmem_budget(phys):
    # Scoped VMEM limit: half of physical -> 64 MiB on v5e/v6e (128 MiB phys),
    # 32 MiB on v7x (64 MiB phys).  Raised above the 16/32 MiB defaults so the
    # bigger tiles below actually fit everywhere.
    return min(phys // 2, 64 << 20)


def _largest_dividing_tile(n, cap, quantum=128):
    """Largest multiple of `quantum` that divides n and is <= cap (0 if none)."""
    best = 0
    t = quantum
    while t <= min(cap, n):
        if n % t == 0:
            best = t
        t += quantum
    return best


# --------------------------------- kernels -----------------------------------

def _flatten_fast_kernel(x_ref, w_ref, b_ref, o_ref):
    # Whole problem VMEM-resident: one dot + bias, a single grid step.
    o_ref[...] = (lax.dot_general(
        x_ref[...], w_ref[...],
        dimension_numbers=(((1,), (1,)), ((), ())),      # x @ W.T (torch (out, in) layout)
        preferred_element_type=jnp.float32) + b_ref[...]).astype(o_ref.dtype)


def _flatten_tiled_kernel(x_ref, w_ref, b_ref, o_ref, *, tk, k_rem, x_resident):
    # (M, N, K)-tiled GEMM.  The f32 output block doubles as the accumulator: its
    # block index is constant across the innermost ("arbitrary") k axis so it stays
    # VMEM-resident; bias is folded into the k==0 init.  NOTE: keep k innermost.
    k = pl.program_id(2)
    nk = pl.num_programs(2)

    @pl.when(k == 0)
    def _():
        o_ref[...] = jnp.broadcast_to(b_ref[...].astype(jnp.float32), o_ref.shape)

    def x_tile():
        if x_resident:
            # x is K-resident (DMA'd once per M tile); slice the current K chunk.
            return x_ref[:, pl.ds(pl.multiple_of(k * tk, 128), tk)]
        return x_ref[...]

    def accum(x, w):
        o_ref[...] += lax.dot_general(
            x, w, dimension_numbers=(((1,), (1,)), ((), ())),
            preferred_element_type=jnp.float32)

    if k_rem:
        # K does not divide into tk tiles: the last W (and streamed-x) tile is a
        # partial block whose out-of-bounds tail is stale VMEM (possibly NaN/Inf).
        # Zero it explicitly -- only on the last k step, so the mask cost is not
        # paid every iteration.
        @pl.when(k < nk - 1)
        def _():
            accum(x_tile(), w_ref[...])

        @pl.when(k == nk - 1)
        def _():
            w = w_ref[...]
            w = jnp.where(lax.broadcasted_iota(jnp.int32, w.shape, 1) < k_rem,
                          w, jnp.zeros_like(w))
            x = x_tile()
            if not x_resident:
                x = jnp.where(lax.broadcasted_iota(jnp.int32, x.shape, 1) < k_rem,
                              x, jnp.zeros_like(x))
            accum(x, w)
    else:
        accum(x_tile(), w_ref[...])


def _max_fast_kernel(x_ref, w_ref, b_ref, o_ref):
    mx = jnp.max(x_ref[...], axis=2)                     # lane reduce -> XLU
    o_ref[...] = (lax.dot_general(
        mx, w_ref[...], dimension_numbers=(((1,), (1,)), ((), ())),
        preferred_element_type=jnp.float32) + b_ref[...]).astype(o_ref.dtype)


def _max_stream_kernel(x_ref, w_ref, b_ref, o_ref, mx_ref, *, s_rem):
    # Streams the (B, C, S) activation over S exactly once (W / bias / output are
    # resident: single N tile).  Running max kept in a (tm, C) f32 scratch.
    s = pl.program_id(1)
    ns = pl.num_programs(1)

    @pl.when(s == 0)
    def _():
        mx_ref[...] = jnp.full_like(mx_ref, -jnp.inf)

    if s_rem:
        @pl.when(s < ns - 1)
        def _():
            mx_ref[...] = jnp.maximum(mx_ref[...], jnp.max(x_ref[...], axis=2))

        @pl.when(s == ns - 1)
        def _():
            x = x_ref[...]
            x = jnp.where(lax.broadcasted_iota(jnp.int32, x.shape, 2) < s_rem,
                          x, -jnp.inf)
            mx_ref[...] = jnp.maximum(mx_ref[...], jnp.max(x, axis=2))
    else:
        mx_ref[...] = jnp.maximum(mx_ref[...], jnp.max(x_ref[...], axis=2))

    @pl.when(s == ns - 1)
    def _():
        y = lax.dot_general(
            mx_ref[...].astype(w_ref.dtype), w_ref[...],
            dimension_numbers=(((1,), (1,)), ((), ())),
            preferred_element_type=jnp.float32)
        o_ref[...] = (y + b_ref[...]).astype(o_ref.dtype)


# ------------------------------ wrappers (glue) -------------------------------

def bottle_encoder_flatten(x, w, b, *, use_bf16=False,
                           _force_tiled=False, _tile_caps=None):
    """pooling='flatten'. x: (B, C, S); w: (OUT, C*S) torch Linear weight; b: (OUT,)."""
    B, C, S = x.shape
    OUT, K = w.shape
    assert K == C * S, "flatten requires w.shape[1] == inp_size * seq_len"

    x2 = x.reshape(B, K)                       # same ordering as torch .view(B, -1)
    b2 = b.reshape(1, OUT).astype(jnp.float32)
    if use_bf16:                               # optional weight-streaming lever; accum stays f32
        x2 = x2.astype(jnp.bfloat16)
        w = w.astype(jnp.bfloat16)
    isz = x2.dtype.itemsize
    w_isz = w.dtype.itemsize

    phys = _tpu_vmem_bytes()
    budget = _vmem_budget(phys)

    # ---- fast path: everything VMEM-resident, one grid step -------------------
    total = isz * B * K + w_isz * OUT * K + 4 * (OUT + B * OUT)
    if not _force_tiled and 2 * total <= int(0.9 * budget):
        return pl.pallas_call(
            _flatten_fast_kernel,
            out_shape=jax.ShapeDtypeStruct((B, OUT), jnp.float32),
            grid_spec=pltpu.PrefetchScalarGridSpec(
                num_scalar_prefetch=0, grid=(1,),
                in_specs=[pl.BlockSpec((B, K), lambda i: (0, 0)),
                          pl.BlockSpec((OUT, K), lambda i: (0, 0)),
                          pl.BlockSpec((1, OUT), lambda i: (0, 0))],
                out_specs=pl.BlockSpec((B, OUT), lambda i: (0, 0))),
            compiler_params=pltpu.CompilerParams(
                dimension_semantics=("arbitrary",),
                vmem_limit_bytes=budget),
        )(x2, w, b2)

    # ---- tiled (M, N, K) path --------------------------------------------------
    # Generation-aware caps: bigger K tiles on 128 MiB-VMEM parts, 2048 on v7x.
    tm_cap, tn_cap, tk_cap = _tile_caps or (128, 512,
                                            4096 if phys >= (96 << 20) else 2048)

    tm = B if B <= tm_cap else tm_cap          # full-dim or multiple-of-8 cap
    tn = OUT if OUT <= tn_cap else tn_cap      # full-dim or multiple-of-128 cap
    mt = pl.cdiv(B, tm)
    nt = pl.cdiv(OUT, tn)
    # v7x megacore: prefer an even number of parallel (i, j) tiles so neither TC idles.
    if phys < (96 << 20) and (mt * nt) % 2 == 1 and nt > 1 and tn > 128:
        tn_half = max(128, ((tn // 2 + 127) // 128) * 128)
        if (mt * pl.cdiv(OUT, tn_half)) % 2 == 0:
            tn = tn_half
            nt = pl.cdiv(OUT, tn)

    # K tiling: prefer a 128-multiple tile that divides K (no in-kernel masking);
    # otherwise cap-size tiles with the last partial tile zero-masked in-kernel.
    if K <= tk_cap:
        tk, k_rem = K, 0
    else:
        tk = _largest_dividing_tile(K, tk_cap)
        if tk >= max(512, tk_cap // 4):
            k_rem = 0
        else:
            tk, k_rem = tk_cap, K % tk_cap
    nk = pl.cdiv(K, tk)
    Kp = nk * tk

    # Keep x fully K-resident (one DMA per M tile instead of one per (N, K) tile)
    # when the row block is small and x would otherwise be re-streamed per N tile.
    x_resident = (nt > 1 and nk > 1
                  and 2 * tm * Kp * isz <= budget // 4
                  and 2 * (tn * tk * w_isz + tm * Kp * isz + tn * 4)
                      + 2 * tm * tn * 4 <= int(0.9 * budget))
    if x_resident:
        if Kp != K:
            # cheap zero K-pad of the (small) activation; the big weight is never
            # copied -- its ragged K tail is zero-masked in-kernel instead.
            x2 = jnp.pad(x2, ((0, 0), (0, Kp - K)))
        x_spec = pl.BlockSpec((tm, Kp), lambda i, j, k: (i, 0))
    else:
        x_spec = pl.BlockSpec((tm, tk), lambda i, j, k: (i, k))

    kernel = functools.partial(_flatten_tiled_kernel,
                               tk=tk, k_rem=k_rem, x_resident=x_resident)
    return pl.pallas_call(
        kernel,
        out_shape=jax.ShapeDtypeStruct((B, OUT), jnp.float32),
        grid_spec=pltpu.PrefetchScalarGridSpec(
            num_scalar_prefetch=0,
            grid=(mt, nt, nk),                          # reduction axis innermost
            in_specs=[x_spec,
                      pl.BlockSpec((tn, tk), lambda i, j, k: (j, k)),
                      pl.BlockSpec((1, tn), lambda i, j, k: (0, j))],
            out_specs=pl.BlockSpec((tm, tn), lambda i, j, k: (i, j))),
        compiler_params=pltpu.CompilerParams(
            dimension_semantics=("parallel", "parallel", "arbitrary"),
            vmem_limit_bytes=budget),
    )(x2, w, b2)


def bottle_encoder_max(x, w, b, *, use_bf16=False, _force_stream=False, _ts=None):
    """pooling='max'. x: (B, C, S); w: (OUT, C) torch Linear weight; b: (OUT,)."""
    B, C, S = x.shape
    OUT = w.shape[0]
    b2 = b.reshape(1, OUT).astype(jnp.float32)
    if use_bf16:
        x = x.astype(jnp.bfloat16)
        w = w.astype(jnp.bfloat16)
    isz = x.dtype.itemsize

    phys = _tpu_vmem_bytes()
    budget = _vmem_budget(phys)

    # ---- fast path: everything VMEM-resident, one grid step -------------------
    total = isz * (B * C * S + OUT * C) + 4 * (OUT + B * OUT)
    if not _force_stream and 2 * total <= int(0.9 * budget):
        return pl.pallas_call(
            _max_fast_kernel,
            out_shape=jax.ShapeDtypeStruct((B, OUT), jnp.float32),
            grid_spec=pltpu.PrefetchScalarGridSpec(
                num_scalar_prefetch=0, grid=(1,),
                in_specs=[pl.BlockSpec((B, C, S), lambda i: (0, 0, 0)),
                          pl.BlockSpec((OUT, C), lambda i: (0, 0)),
                          pl.BlockSpec((1, OUT), lambda i: (0, 0))],
                out_specs=pl.BlockSpec((B, OUT), lambda i: (0, 0))),
            compiler_params=pltpu.CompilerParams(
                dimension_semantics=("arbitrary",),
                vmem_limit_bytes=budget),
        )(x, w, b2)

    # ---- streaming path: W (OUT x C) is tiny -> keep it (and bias/output) resident
    # so the dominant (B, C, S) read from HBM happens exactly once; stream big S tiles.
    tm = B if B <= 256 else 256
    while tm > 8 and 2 * tm * C * 128 * isz > int(0.6 * budget):
        tm = max(8, (tm // 2) // 8 * 8)
    mt = pl.cdiv(B, tm)

    if _ts is not None:
        ts = _ts                                        # test-only override
    else:
        ts_budget = int(0.6 * budget) // max(1, 2 * tm * C * isz)   # x double-buffer budget
        if ts_budget >= S or S <= 128:
            ts = S
        else:
            ts = max(128, min(ts_budget, S) // 128 * 128)
    st = pl.cdiv(S, ts)
    s_rem = S % ts

    kernel = functools.partial(_max_stream_kernel, s_rem=s_rem)
    return pl.pallas_call(
        kernel,
        out_shape=jax.ShapeDtypeStruct((B, OUT), jnp.float32),
        grid_spec=pltpu.PrefetchScalarGridSpec(
            num_scalar_prefetch=0,
            grid=(mt, st),
            in_specs=[pl.BlockSpec((tm, C, ts), lambda i, s: (i, 0, s)),
                      pl.BlockSpec((OUT, C), lambda i, s: (0, 0)),
                      pl.BlockSpec((1, OUT), lambda i, s: (0, 0))],
            out_specs=pl.BlockSpec((tm, OUT), lambda i, s: (i, 0)),
            scratch_shapes=[pltpu.VMEM((tm, C), jnp.float32)]),
        compiler_params=pltpu.CompilerParams(
            dimension_semantics=("parallel", "arbitrary"),
            vmem_limit_bytes=budget),
    )(x, w, b2)


# ----------------------------------- main --------------------------------------

if __name__ == "__main__":
    hp = lax.Precision.HIGHEST

    def _linear_init(key, out_f, in_f):
        kw, kb = jax.random.split(key)
        bound = 1.0 / float(in_f) ** 0.5
        w = jax.random.uniform(kw, (out_f, in_f), jnp.float32, -bound, bound)
        b = jax.random.uniform(kb, (out_f,), jnp.float32, -bound, bound)
        return w, b

    def _ref_flatten(x, w, b):
        return jnp.matmul(x.reshape(x.shape[0], -1), w.T, precision=hp) + b

    def _ref_max(x, w, b):
        return jnp.matmul(jnp.max(x, axis=2), w.T, precision=hp) + b

    key = jax.random.PRNGKey(0)
    ks = jax.random.split(key, 12)

    # ---- 1. small shapes (module docstring scale) -> single-step fast path ------
    B, C, S, OUT = 2, 4, 16, 32
    x = jax.random.normal(ks[0], (B, C, S), dtype=jnp.float32)
    wf, bf = _linear_init(ks[1], OUT, C * S)
    wm, bm = _linear_init(ks[2], OUT, C)

    y = jax.block_until_ready(bottle_encoder_flatten(x, wf, bf))
    assert y.shape == (B, OUT)
    assert jnp.allclose(y, _ref_flatten(x, wf, bf), atol=1e-3, rtol=1e-3)

    y = jax.block_until_ready(bottle_encoder_max(x, wm, bm))
    assert y.shape == (B, OUT)
    assert jnp.allclose(y, _ref_max(x, wm, bm), atol=1e-3, rtol=1e-3)

    # optional bf16 weight-streaming lever (f32 accumulation, looser tolerance)
    y = jax.block_until_ready(bottle_encoder_flatten(x, wf, bf, use_bf16=True))
    assert jnp.allclose(y, _ref_flatten(x, wf, bf), atol=2e-2, rtol=2e-2)

    # ---- 2. tiled GEMM path: multi-N grid, K-resident x, exact-dividing K tiles --
    B2, C2, S2, OUT2 = 16, 32, 96, 300            # K = 3072
    x2 = jax.random.normal(ks[3], (B2, C2, S2), dtype=jnp.float32)
    w2, b2 = _linear_init(ks[4], OUT2, C2 * S2)
    y2 = jax.block_until_ready(bottle_encoder_flatten(
        x2, w2, b2, _force_tiled=True, _tile_caps=(16, 128, 1024)))
    assert y2.shape == (B2, OUT2)
    assert jnp.allclose(y2, _ref_flatten(x2, w2, b2), atol=1e-3, rtol=1e-3)

    # ---- 3. tiled GEMM path: ragged K (masked last tile), streamed x, single N ---
    B3, C3, S3, OUT3 = 4, 9, 100, 64              # K = 900 (not a multiple of 128)
    x3 = jax.random.normal(ks[5], (B3, C3, S3), dtype=jnp.float32)
    w3, b3 = _linear_init(ks[6], OUT3, C3 * S3)
    y3 = jax.block_until_ready(bottle_encoder_flatten(
        x3, w3, b3, _force_tiled=True, _tile_caps=(8, 512, 256)))
    assert jnp.allclose(y3, _ref_flatten(x3, w3, b3), atol=1e-3, rtol=1e-3)

    # ---- 4. tiled GEMM path: ragged K + K-resident (zero-padded) x + multi-N -----
    B4, C4, S4, OUT4 = 8, 9, 100, 300
    x4 = jax.random.normal(ks[7], (B4, C4, S4), dtype=jnp.float32)
    w4, b4 = _linear_init(ks[8], OUT4, C4 * S4)
    y4 = jax.block_until_ready(bottle_encoder_flatten(
        x4, w4, b4, _force_tiled=True, _tile_caps=(8, 128, 256)))
    assert jnp.allclose(y4, _ref_flatten(x4, w4, b4), atol=1e-3, rtol=1e-3)

    # ---- 5. max pooling, streaming-S path with ragged last S tile ----------------
    B5, C5, S5, OUT5 = 10, 8, 300, 40
    x5 = jax.random.normal(ks[9], (B5, C5, S5), dtype=jnp.float32)
    w5, b5 = _linear_init(ks[10], OUT5, C5)
    y5 = jax.block_until_ready(bottle_encoder_max(
        x5, w5, b5, _force_stream=True, _ts=128))
    assert y5.shape == (B5, OUT5)
    assert jnp.allclose(y5, _ref_max(x5, w5, b5), atol=1e-3, rtol=1e-3)

    print("KERNEL_OK")
</pallas_src>

<mosaic_0001>
module attributes {stable_mosaic.version = 11 : i64} {
  func.func @_flatten_fast_kernel(%arg0: i32, %arg1: memref<2x64xf32, #tpu.memory_space<vmem>>, %arg2: memref<32x64xf32, #tpu.memory_space<vmem>>, %arg3: memref<1x32xf32, #tpu.memory_space<vmem>>, %arg4: memref<2x32xf32, #tpu.memory_space<vmem>>) attributes {dimension_semantics = [#tpu.dimension_semantics<arbitrary>], iteration_bounds = array<i64: 1>, scalar_prefetch = 0 : i64, scratch_operands = 0 : i64, tpu.core_type = #tpu.core_type<tc>, window_params = [{pipeline_mode = #tpu.pipeline_mode<synchronous>, transform_indices = @transform_0, window_bounds = array<i64: 2, 64>}, {pipeline_mode = #tpu.pipeline_mode<synchronous>, transform_indices = @transform_1, window_bounds = array<i64: 32, 64>}, {pipeline_mode = #tpu.pipeline_mode<synchronous>, transform_indices = @transform_2, window_bounds = array<i64: 1, 32>}, {pipeline_mode = #tpu.pipeline_mode<synchronous>, transform_indices = @transform_3, window_bounds = array<i64: 2, 32>}]} {
    %c0 = arith.constant 0 : index
    %c0_0 = arith.constant 0 : index
    %0 = vector.load %arg1[%c0, %c0_0] : memref<2x64xf32, #tpu.memory_space<vmem>>, vector<2x64xf32>
    %c0_1 = arith.constant 0 : index
    %c0_2 = arith.constant 0 : index
    %1 = vector.load %arg2[%c0_1, %c0_2] : memref<32x64xf32, #tpu.memory_space<vmem>>, vector<32x64xf32>
    %cst = arith.constant dense<0.000000e+00> : vector<2x32xf32>
    %2 = tpu.matmul %0, %1, %cst {dimension_numbers = #tpu.dot_dimension_numbers<[1], [1], [0], [0], [0, 0, 1, 0], [], []>} : vector<2x64xf32>, vector<32x64xf32>, vector<2x32xf32> -> vector<2x32xf32>
    %c0_3 = arith.constant 0 : index
    %c0_4 = arith.constant 0 : index
    %3 = vector.load %arg3[%c0_3, %c0_4] : memref<1x32xf32, #tpu.memory_space<vmem>>, vector<1x32xf32>
    %4 = vector.broadcast %3 : vector<1x32xf32> to vector<2x32xf32>
    %5 = arith.addf %2, %4 : vector<2x32xf32>
    %c0_5 = arith.constant 0 : index
    %c0_6 = arith.constant 0 : index
    %6 = vector.load %arg4[%c0_5, %c0_6] : memref<2x32xf32, #tpu.memory_space<vmem>>, vector<2x32xf32>
    tpu.vector_store %arg4[%c0_5, %c0_6], %5 {strides = array<i32>} : memref<2x32xf32, #tpu.memory_space<vmem>>, vector<2x32xf32>,
    return
  }
  func.func @transform_0(%arg0: i32) -> (i32, i32) {
    %c0_i32 = arith.constant 0 : i32
    %c0_i32_0 = arith.constant 0 : i32
    %c0_i32_1 = arith.constant 0 : i32
    return %c0_i32, %c0_i32_0 : i32, i32
  }
  func.func @transform_1(%arg0: i32) -> (i32, i32) {
    %c0_i32 = arith.constant 0 : i32
    %c0_i32_0 = arith.constant 0 : i32
    %c0_i32_1 = arith.constant 0 : i32
    return %c0_i32, %c0_i32_0 : i32, i32
  }
  func.func @transform_2(%arg0: i32) -> (i32, i32) {
    %c0_i32 = arith.constant 0 : i32
    %c0_i32_0 = arith.constant 0 : i32
    %c0_i32_1 = arith.constant 0 : i32
    return %c0_i32, %c0_i32_0 : i32, i32
  }
  func.func @transform_3(%arg0: i32) -> (i32, i32) {
    %c0_i32 = arith.constant 0 : i32
    %c0_i32_0 = arith.constant 0 : i32
    %c0_i32_1 = arith.constant 0 : i32
    return %c0_i32, %c0_i32_0 : i32, i32
  }
}

</mosaic_0001>

<llo_original>
// kernel: tpu_custom_call.1
$region0: #{tpu_custom_call.1}
  #allocation0 [shape = 'u32[]', space=smem, size = 0x4, offset = 0x4, fixed_abs, tag = 'smem constant byte address 0x4 - core index']
  #allocation1 [shape = 'u32[144,128]{1,0:T(1,128)}', space=vmem, size = 0x12000, scoped, tag = 'internal scratch']
  %s0 = inlined_call_operand.hbm [shape: f32[2,64], index: 0, kind: input, shape index: {}]
  %s1 = inlined_call_operand.hbm [shape: f32[32,64], index: 1, kind: input, shape index: {}]
  %s2 = inlined_call_operand.vmem [shape: f32[1,32], index: 2, kind: input, shape index: {}]
  %s3 = inlined_call_operand.hbm [shape: f32[2,32], index: 3, kind: output, shape index: {}]
  %s4 = sld [smem:[#allocation0]]
  $region30: #{tpu_custom_call.1} parent=0
    _
  %s6 = ssub.s32 1, %s4
  %s7 = scalar_select 0, %s6, %s4
  $region1: #{tpu_custom_call.1} parent=0
    #allocation2 [shape = 'u8[1024]{0}', space=vmem, size = 0x400, scoped, tag = 'input window, operand 0, single buffered']
    #allocation3 [shape = 's32[1]{0}', space=sflag, size = 0x4, scoped, tag = 'scoped memory for tpu_custom_call.1']
    #allocation4 [shape = 's32[1]{0}', space=sflag, size = 0x4, scoped, tag = 'scoped memory for tpu_custom_call.1']
    #allocation5 [shape = 'u8[16384]{0}', space=vmem, size = 0x4000, scoped, tag = 'input window, operand 1, single buffered']
    #allocation6 [shape = 's32[1]{0}', space=sflag, size = 0x4, scoped, tag = 'scoped memory for tpu_custom_call.1']
    #allocation7 [shape = 'u8[1024]{0}', space=vmem, size = 0x400, scoped, tag = 'output window, operand 0, single buffered']
    %8 = vsyncpa [#allocation3], 0
    %9 = vsyncpa [#allocation6], 0
    %10 = vsyncpa [#allocation4], 0
    // Predicated region
    $region2: #{tpu_custom_call.1} parent=1 // pred_check
      _
    $region3: #{tpu_custom_call.1} parent=1 // pred_check_branch
      %12 = sbr.rel (0) target = $region5
    $region4: #{tpu_custom_call.1} parent=1 // pred_region
      %s14 = ssub.s32 32, 32
      %15 = vsyncadd [#allocation3], %s14
      %s17 = sshll.u32 [#allocation2], 4
      %s18 = int_to_ptr.vmem [resolvable:$true] %s17
      %20 = dma.hbm_to_vmem [thread:$0]  %s0, 32, %s18, [#allocation3]
    $region5: #{tpu_custom_call.1} parent=1 // pred_fallthru
      _
    // Predicated region
    $region6: #{tpu_custom_call.1} parent=1 // pred_check
      _
    $region7: #{tpu_custom_call.1} parent=1 // pred_check_branch
      %22 = sbr.rel (0) target = $region9
    $region8: #{tpu_custom_call.1} parent=1 // pred_region
      %s24 = ssub.s32 512, 512
      %25 = vsyncadd [#allocation6], %s24
      %s26 = sshll.u32 [#allocation5], 4
      %s27 = int_to_ptr.vmem [resolvable:$true] %s26
      %32 = dma.hbm_to_vmem [thread:$0]  %s1, 512, %s27, [#allocation6], 128, 128, 8
    $region9: #{tpu_custom_call.1} parent=1 // pred_fallthru
      _
    // Predicated region
    $region10: #{tpu_custom_call.1} parent=1 // pred_check
      _
    $region11: #{tpu_custom_call.1} parent=1 // pred_check_branch
      %34 = sbr.rel (0) target = $region13
    $region12: #{tpu_custom_call.1} parent=1 // pred_region
      _
    $region13: #{tpu_custom_call.1} parent=1 // pred_fallthru
      _
    // Predicated region
    $region14: #{tpu_custom_call.1} parent=1 // pred_check
      _
    $region15: #{tpu_custom_call.1} parent=1 // pred_check_branch
      %36 = sbr.rel (0) target = $region17
    $region16: #{tpu_custom_call.1} parent=1 // pred_region
      %37 = dma.done [#allocation3], 32
    $region17: #{tpu_custom_call.1} parent=1 // pred_fallthru
      _
    // Predicated region
    $region18: #{tpu_custom_call.1} parent=1 // pred_check
      _
    $region19: #{tpu_custom_call.1} parent=1 // pred_check_branch
      %39 = sbr.rel (0) target = $region21
    $region20: #{tpu_custom_call.1} parent=1 // pred_region
      %40 = dma.done [#allocation6], 512
    $region21: #{tpu_custom_call.1} parent=1 // pred_fallthru
      _
    %v41 = vld [vmem:[#allocation2] sm:$0x3]
    %v42 = vld [vmem:[#allocation5] sm:$0xff]
    %v43 = vld [vmem:[#allocation5 + $0x8] sm:$0xff]
    %v44 = vld [vmem:[#allocation5 + $0x10] sm:$0xff]
    %v45 = vld [vmem:[#allocation5 + $0x18] sm:$0xff]
    %v46 = vld [vmem:[%s2] sm:$0x1]
    %v48 = vlaneseq
    %v49 = vshrl.u32 %v48, 7
    %v50 = vsub.s32 0, %v49
    %v51 = vrot.slane %v46, %v50
    %vm53 = vcmask 523264
    %v55 = vsel %vm53, %v41, 0
    %v58 = vsel %vm53, %v42, 0
    %v61 = vsel %vm53, %v43, 0
    %v64 = vsel %vm53, %v44, 0
    %v67 = vsel %vm53, %v45, 0
    %69 = vmatprep.subr.mxu0 0.0
    %70 = vmatpush1.xpose.msra.mxu0 %v58
    %71 = vmatprep.subr.mxu0 0.0
    %72 = vmatpush1.xpose.msra.mxu0 %v61
    %73 = vmatprep.subr.mxu0 0.0
    %74 = vmatpush1.xpose.msra.mxu0 %v64
    %75 = vmatprep.subr.mxu0 0.0
    %76 = vmatpush1.xpose.msra.mxu0 %v67
    %77 = vmatprep.subr.mxu0 0.0
    %78 = vmatpush1.xpose.msra.mxu0 0.0
    %79 = vmatprep.subr.mxu0 0.0
    %80 = vmatpush1.xpose.msra.mxu0 0.0
    %81 = vmatprep.subr.mxu0 0.0
    %82 = vmatpush1.xpose.msra.mxu0 0.0
    %83 = vmatprep.subr.mxu0 0.0
    %84 = vmatpush1.xpose.msra.mxu0 0.0
    %85 = vmatprep.subr.mxu0 0.0
    %86 = vmatpush1.xpose.msra.mxu0 0.0
    %87 = vmatprep.subr.mxu0 0.0
    %88 = vmatpush1.xpose.msra.mxu0 0.0
    %89 = vmatprep.subr.mxu0 0.0
    %90 = vmatpush1.xpose.msra.mxu0 0.0
    %91 = vmatprep.subr.mxu0 0.0
    %92 = vmatpush1.xpose.msra.mxu0 0.0
    %93 = vmatprep.subr.mxu0 0.0
    %94 = vmatpush1.xpose.msra.mxu0 0.0
    %95 = vmatprep.subr.mxu0 0.0
    %96 = vmatpush1.xpose.msra.mxu0 0.0
    %97 = vmatprep.subr.mxu0 0.0
    %98 = vmatpush1.xpose.msra.mxu0 0.0
    %99 = vmatprep.subr.mxu0 0.0
    %100 = vmatpush1.xpose.msra.mxu0 0.0
    %101 = vmatprep.subr.mxu0 0.0
    %102 = vmatpush1.xpose.msra.mxu0 0.0
    %103 = vmatprep.subr.mxu0 0.0
    %104 = vmatpush1.xpose.msra.mxu0 0.0
    %105 = vmatprep.subr.mxu0 0.0
    %106 = vmatpush1.xpose.msra.mxu0 0.0
    %107 = vmatprep.subr.mxu0 0.0
    %108 = vmatpush1.xpose.msra.mxu0 0.0
    %109 = vmatprep.subr.mxu0 0.0
    %110 = vmatpush1.xpose.msra.mxu0 0.0
    %111 = vmatprep.subr.mxu0 0.0
    %112 = vmatpush1.xpose.msra.mxu0 0.0
    %113 = vmatprep.subr.mxu0 0.0
    %114 = vmatpush1.xpose.msra.mxu0 0.0
    %115 = vmatprep.subr.mxu0 0.0
    %116 = vmatpush1.xpose.msra.mxu0 0.0
    %117 = vmatprep.subr.mxu0 0.0
    %118 = vmatpush1.xpose.msra.mxu0 0.0
    %119 = vmatprep.subr.mxu0 0.0
    %120 = vmatpush1.xpose.msra.mxu0 0.0
    %121 = vmatprep.subr.mxu0 0.0
    %122 = vmatpush1.xpose.msra.mxu0 0.0
    %123 = vmatprep.subr.mxu0 0.0
    %124 = vmatpush1.xpose.msra.mxu0 0.0
    %125 = vmatprep.subr.mxu0 0.0
    %126 = vmatpush1.xpose.msra.mxu0 0.0
    %127 = vmatprep.subr.mxu0 0.0
    %128 = vmatpush1.xpose.msra.mxu0 0.0
    %129 = vmatprep.subr.mxu0 0.0
    %130 = vmatpush1.xpose.msra.mxu0 0.0
    %131 = vmatprep.subr.mxu0 0.0
    %132 = vmatpush1.xpose.msra.mxu0 0.0
    %133 = vmatprep.mubr.f32.mxu0 0.0
    %134 = vmatmul.mubr.f32.gmra.mrb[0].mxu0 %v55
    %v135 = vpop.f32.mrb[0].mxu0
    %v136 = vadd.f32 %v51, %v135
    %v137 = vpop.f32.mrb[0].mxu0
    %138 = vdwg.mxu0
    %vm139 = vcmask 254976
    %140 = vst.msk [vmem:[#allocation7] sm:$0x3] %vm139, %v136
    // Predicated region
    $region22: #{tpu_custom_call.1} parent=1 // pred_check
      _
    $region23: #{tpu_custom_call.1} parent=1 // pred_check_branch
      %142 = sbr.rel (0) target = $region25
    $region24: #{tpu_custom_call.1} parent=1 // pred_region
      %s144 = ssub.s32 32, 32
      %145 = vsyncadd [#allocation4], %s144
      %s147 = sshll.u32 [#allocation7], 4
      %s148 = int_to_ptr.vmem [resolvable:$true] %s147
      %150 = dma.vmem_to_hbm [thread:$0]  %s148, 32, %s3, [#allocation4]
    $region25: #{tpu_custom_call.1} parent=1 // pred_fallthru
      _
    // Predicated region
    $region26: #{tpu_custom_call.1} parent=1 // pred_check
      _
    $region27: #{tpu_custom_call.1} parent=1 // pred_check_branch
      %152 = sbr.rel (0) target = $region29
    $region28: #{tpu_custom_call.1} parent=1 // pred_region
      %153 = dma.done [#allocation4], 32
    $region29: #{tpu_custom_call.1} parent=1 // pred_fallthru
      _
    %154 = vsyncpa [#allocation3], 1
    %155 = vsyncpa [#allocation6], 1
    %156 = vsyncpa [#allocation4], 1

</llo_original>
